<compile_context>
chip_gen: v6e
topology: v6e:2x2x1
jax: 0.10.0
libtpu: 0.0.40
codegen_flags: <defaults>
</compile_context>

<pallas_src>
import functools

import jax
import jax.numpy as jnp
import numpy as np
from jax.experimental import pallas as pl
from jax.experimental.pallas import tpu as pltpu


def _laguerre_basis(degree: int, seq_len: int, x_max: float = 5.0) -> np.ndarray:
    """Weighted Laguerre quadrature basis: W[k, s] = dx * exp(-x_s) * L_k(x_s)."""
    # TODO(synk): exact sampling/quadrature convention of the original
    # laguerre_torch was not provided; this uses the standard Laguerre
    # recurrence with an exp(-x) weight on a uniform grid over [0, x_max].
    x = np.linspace(0.0, x_max, seq_len, dtype=np.float64)
    dx = x_max / max(seq_len - 1, 1)
    L = np.zeros((degree + 1, seq_len), dtype=np.float64)
    L[0] = 1.0
    if degree >= 1:
        L[1] = 1.0 - x
    for k in range(1, degree):
        L[k + 1] = ((2.0 * k + 1.0 - x) * L[k] - k * L[k - 1]) / (k + 1.0)
    W = dx * np.exp(-x)[None, :] * L
    return W.astype(np.float32)


def _expanded_basis(degree: int, seq_len: int, channels: int) -> np.ndarray:
    """Channel-expanded basis Wexp = kron(W.T, I_C), shape (S*C, (deg+1)*C).

    With inputs flattened to (B, S*C), a single lane-dense 2-D matmul
        coeff_flat = d_flat @ Wexp        # (B, (degree+1)*C)
    reproduces coeff[b, k, c] = sum_s W[k, s] * d[b, s, c].
    """
    # TODO(synk): for very large S or C the kron-expanded basis grows as
    # S*(degree+1)*C^2 (VMEM footprint + MXU K-dim inflation by C); a
    # channel-tiled / dot_general-over-S variant is needed there.
    W = _laguerre_basis(degree, seq_len)                          # (D, S)
    return np.kron(W.T, np.eye(channels, dtype=np.float32))       # (S*C, D*C)


def _laguerre_loss_kernel(basis_ref, pred_ref, tgt_ref, out_ref, *,
                          batch, tile_b, need_mask, sub_dtype):
    # Single projection of the difference: |W@p - W@t| == |W@(p-t)|.
    # Subtract in the streaming dtype (bf16 on v6e/v7x; astype is a no-op when
    # the ref already carries sub_dtype); MXU accumulates in f32.
    d = pred_ref[...].astype(sub_dtype) - tgt_ref[...].astype(sub_dtype)
    coeff = jnp.dot(d, basis_ref[...], preferred_element_type=jnp.float32)

    if need_mask:
        # Mask padded batch rows AFTER the matmul: only (TB, D*C) elements are
        # touched (vs (TB, S*C) pre-matmul), and the select still discards any
        # garbage/NaN produced by the out-of-bounds tail rows.
        rows = pl.program_id(0) * tile_b + jax.lax.broadcasted_iota(
            jnp.int32, coeff.shape, 0)
        coeff = jnp.where(rows < batch, coeff, 0.0)

    # One partial reduce per chunk; scaling by 1/(B*D*C) happens in the
    # wrapper.  Output block is (1,1,1): its last two dims equal the full
    # array dims, so the store needs no (8,128) padding.
    out_ref[...] = jnp.sum(jnp.abs(coeff), keepdims=True).reshape(1, 1, 1)


def _pick_batch_tile(batch, flat_len, elem_bytes):
    """Rows per grid chunk.

    * sublane-aligned for the streaming dtype (8 f32 / 16 bf16 / 32 int8),
    * small enough that each streamed tile is <= ~1 MiB (HBM roofline is
      already saturated there; bigger tiles only burn VMEM),
    * capped at batch//2 so there are always >= 2 chunks (v7x megacore can
      shard the "parallel" grid axis across its two TensorCores),
    * biased toward a TB that divides the batch (no masked tail chunk).
    """
    sub = {1: 32, 2: 16}.get(elem_bytes, 8)
    if batch <= 2 * sub:
        return batch                                   # single full-batch block
    per_row = max(flat_len * elem_bytes, 1)
    tb = min(2048, max(sub, (1 << 20) // per_row))     # ~1 MiB streamed tile
    tb = min(tb, batch // 2)                           # guarantee >= 2 chunks
    tb = max(sub, (tb // sub) * sub)
    if batch % tb:                                     # try to drop the masked tail
        for cand in range(tb, sub - 1, -sub):
            if batch % cand == 0:
                if 2 * cand >= tb:
                    tb = cand
                break
    return tb


def _vmem_limit_bytes(tb, sc, dc, stream_bytes, compute_bytes):
    """Scoped-VMEM limit derived from the actual footprint (+2x headroom)."""
    streamed = 2 * 2 * tb * sc * stream_bytes      # pred+tgt tiles, double-buffered
    # TODO(synk): the basis block has a constant index_map and could be
    # single-buffered (pipeline_mode=pl.Buffered(1)); budget 2x to stay safe.
    basis = 2 * sc * dc * compute_bytes
    work = tb * sc * compute_bytes + 2 * tb * dc * 4   # d, coeff (+ mask temp)
    est = streamed + basis + work + 64
    return int(min(48 << 20, max(32 << 20, 2 * est)))  # <= 48 MiB (v7x-safe)


def _native_bf16_ok() -> bool:
    """bf16 VALU exists on v6e/v7x; keep f32 subtract elsewhere (e.g. v5e)."""
    try:
        kind = jax.devices()[0].device_kind.lower()
    except Exception:
        return False
    return ("v6" in kind) or ("v7" in kind)


def laguerre_loss(predictions, targets, degree: int = 4):
    """Pallas implementation of LaguerreLoss.forward.

    predictions/targets: (batch, seq_len, channels) float arrays (streamed at
    native width).  Returns scalar float32 loss
    = mean(|laguerre(pred) - laguerre(target)|).
    """
    B, S, C = predictions.shape
    D = degree + 1
    SC = S * C

    # (B, S, C) -> (B, S*C): pure metadata reshape; channels ride the lane
    # dimension densely inside the kernel.
    pred2d = predictions.reshape(B, SC)
    tgt2d = targets.reshape(B, SC)

    in_dtype = jnp.dtype(predictions.dtype)
    if in_dtype == jnp.dtype(jnp.bfloat16) and _native_bf16_ok():
        sub_dtype = jnp.bfloat16           # bf16 subtract + native bf16 MXU
    else:
        sub_dtype = jnp.float32
    compute_bytes = jnp.dtype(sub_dtype).itemsize

    basis = jnp.asarray(_expanded_basis(degree, S, C), dtype=sub_dtype)  # (S*C, D*C)

    TB = _pick_batch_tile(B, SC, in_dtype.itemsize)
    num_chunks = pl.cdiv(B, TB)
    need_mask = (B % TB) != 0
    vmem_limit = _vmem_limit_bytes(TB, SC, D * C, in_dtype.itemsize, compute_bytes)

    partials = pl.pallas_call(
        functools.partial(_laguerre_loss_kernel, batch=B, tile_b=TB,
                          need_mask=need_mask, sub_dtype=sub_dtype),
        out_shape=jax.ShapeDtypeStruct((num_chunks, 1, 1), jnp.float32),
        grid_spec=pltpu.PrefetchScalarGridSpec(
            num_scalar_prefetch=0,
            grid=(num_chunks,),
            in_specs=[
                pl.BlockSpec((SC, D * C), lambda i: (0, 0)),   # resident basis
                pl.BlockSpec((TB, SC), lambda i: (i, 0)),      # predictions chunk
                pl.BlockSpec((TB, SC), lambda i: (i, 0)),      # targets chunk
            ],
            out_specs=pl.BlockSpec((1, 1, 1), lambda i: (i, 0, 0)),  # per-chunk partial
        ),
        compiler_params=pltpu.CompilerParams(
            dimension_semantics=("parallel",),      # >=2 chunks -> megacore-shardable
            vmem_limit_bytes=vmem_limit,
        ),
    )(basis, pred2d, tgt2d)

    inv_count = 1.0 / float(B * D * C)
    return jnp.sum(partials) * inv_count


def _reference_loss(predictions, targets, degree: int = 4):
    """Pure-JAX reference (two projections, f32) for correctness checking."""
    S = predictions.shape[1]
    W = jnp.asarray(_laguerre_basis(degree, S))
    cp = jnp.einsum("ds,bsc->bdc", W, predictions.astype(jnp.float32))
    ct = jnp.einsum("ds,bsc->bdc", W, targets.astype(jnp.float32))
    return jnp.mean(jnp.abs(cp - ct))


if __name__ == "__main__":
    key = jax.random.PRNGKey(0)
    degree = 4
    S, C = 16, 8
    k1, k2, k3, k4, k5, k6 = jax.random.split(key, 6)

    # Case 1: tiny batch (spec-sized) -> single full-batch chunk, f32.
    B = 2
    p = jax.random.normal(k1, (B, S, C), dtype=jnp.float32)
    t = jax.random.normal(k2, (B, S, C), dtype=jnp.float32)
    out = jax.block_until_ready(laguerre_loss(p, t, degree=degree))
    ref = jax.block_until_ready(_reference_loss(p, t, degree=degree))
    assert jnp.allclose(out, ref, rtol=2e-5, atol=1e-6), (out, ref)

    # Case 2: multi-chunk parallel grid with a masked tail chunk, f32.
    B = 44
    p = jax.random.normal(k3, (B, S, C), dtype=jnp.float32)
    t = jax.random.normal(k4, (B, S, C), dtype=jnp.float32)
    out = jax.block_until_ready(laguerre_loss(p, t, degree=degree))
    ref = jax.block_until_ready(_reference_loss(p, t, degree=degree))
    assert jnp.allclose(out, ref, rtol=2e-5, atol=1e-6), (out, ref)

    # Case 3: bf16 streaming path (native bf16 subtract/MXU on v6e/v7x).
    B = 40
    p = jax.random.normal(k5, (B, S, C), dtype=jnp.float32).astype(jnp.bfloat16)
    t = jax.random.normal(k6, (B, S, C), dtype=jnp.float32).astype(jnp.bfloat16)
    out = jax.block_until_ready(laguerre_loss(p, t, degree=degree))
    ref = jax.block_until_ready(_reference_loss(p, t, degree=degree))
    assert jnp.allclose(out, ref, rtol=3e-2, atol=1e-3), (out, ref)

    print("KERNEL_OK")
</pallas_src>

<mosaic_0001>
module attributes {stable_mosaic.version = 11 : i64} {
  func.func @_laguerre_loss_kernel(%arg0: i32, %arg1: memref<128x40xf32, #tpu.memory_space<vmem>>, %arg2: memref<2x128xf32, #tpu.memory_space<vmem>>, %arg3: memref<2x128xf32, #tpu.memory_space<vmem>>, %arg4: memref<1x1x1xf32, #tpu.memory_space<vmem>>) attributes {dimension_semantics = [#tpu.dimension_semantics<parallel>], iteration_bounds = array<i64: 1>, scalar_prefetch = 0 : i64, scratch_operands = 0 : i64, tpu.core_type = #tpu.core_type<tc>, window_params = [{pipeline_mode = #tpu.pipeline_mode<synchronous>, transform_indices = @transform_0, window_bounds = array<i64: 128, 40>}, {transform_indices = @transform_1, window_bounds = array<i64: 2, 128>}, {transform_indices = @transform_2, window_bounds = array<i64: 2, 128>}, {transform_indices = @transform_3, window_bounds = array<i64: 1, 1, 1>}]} {
    %c0 = arith.constant 0 : index
    %c0_0 = arith.constant 0 : index
    %0 = vector.load %arg2[%c0, %c0_0] : memref<2x128xf32, #tpu.memory_space<vmem>>, vector<2x128xf32>
    %c0_1 = arith.constant 0 : index
    %c0_2 = arith.constant 0 : index
    %1 = vector.load %arg3[%c0_1, %c0_2] : memref<2x128xf32, #tpu.memory_space<vmem>>, vector<2x128xf32>
    %2 = arith.subf %0, %1 : vector<2x128xf32>
    %c0_3 = arith.constant 0 : index
    %c0_4 = arith.constant 0 : index
    %3 = vector.load %arg1[%c0_3, %c0_4] : memref<128x40xf32, #tpu.memory_space<vmem>>, vector<128x40xf32>
    %cst = arith.constant dense<0.000000e+00> : vector<2x40xf32>
    %4 = tpu.matmul %2, %3, %cst {dimension_numbers = #tpu.dot_dimension_numbers<[1], [0], [0], [1], [0, 0, 1, 1], [], []>} : vector<2x128xf32>, vector<128x40xf32>, vector<2x40xf32> -> vector<2x40xf32>
    %5 = math.absf %4 : vector<2x40xf32>
    %6 = vector.shape_cast %5 : vector<2x40xf32> to vector<1x2x40xf32>
    %cst_5 = arith.constant dense<0.000000e+00> : vector<1xf32>
    %7 = vector.multi_reduction <add>, %6, %cst_5 [1, 2] : vector<1x2x40xf32> to vector<1xf32>
    %8 = vector.shape_cast %7 : vector<1xf32> to vector<1x1x1xf32>
    %9 = vector.extract %8[0, 0, 0] : f32 from vector<1x1x1xf32>
    %10 = vector.broadcast %9 : f32 to vector<1x1xf32>
    %11 = vector.shape_cast %10 : vector<1x1xf32> to vector<1x1x1xf32>
    %c0_6 = arith.constant 0 : index
    %c0_7 = arith.constant 0 : index
    %c0_8 = arith.constant 0 : index
    %12 = vector.load %arg4[%c0_6, %c0_7, %c0_8] : memref<1x1x1xf32, #tpu.memory_space<vmem>>, vector<1x1x1xf32>
    tpu.vector_store %arg4[%c0_6, %c0_7, %c0_8], %11 {strides = array<i32>} : memref<1x1x1xf32, #tpu.memory_space<vmem>>, vector<1x1x1xf32>,
    return
  }
  func.func @transform_0(%arg0: i32) -> (i32, i32) {
    %c0_i32 = arith.constant 0 : i32
    %c0_i32_0 = arith.constant 0 : i32
    %c0_i32_1 = arith.constant 0 : i32
    return %c0_i32, %c0_i32_0 : i32, i32
  }
  func.func @transform_1(%arg0: i32) -> (i32, i32) {
    %c0_i32 = arith.constant 0 : i32
    %c0_i32_0 = arith.constant 0 : i32
    return %arg0, %c0_i32 : i32, i32
  }
  func.func @transform_2(%arg0: i32) -> (i32, i32) {
    %c0_i32 = arith.constant 0 : i32
    %c0_i32_0 = arith.constant 0 : i32
    return %arg0, %c0_i32 : i32, i32
  }
  func.func @transform_3(%arg0: i32) -> (i32, i32, i32) {
    %c0_i32 = arith.constant 0 : i32
    %c0_i32_0 = arith.constant 0 : i32
    %c0_i32_1 = arith.constant 0 : i32
    return %arg0, %c0_i32, %c0_i32_0 : i32, i32, i32
  }
}

</mosaic_0001>

<llo_original>
// kernel: tpu_custom_call.1
$region0: #{tpu_custom_call.1}
  #allocation0 [shape = 'u32[]', space=smem, size = 0x4, offset = 0x4, fixed_abs, tag = 'smem constant byte address 0x4 - core index']
  #allocation1 [shape = 'u32[144,128]{1,0:T(1,128)}', space=vmem, size = 0x12000, scoped, tag = 'internal scratch']
  %s0 = inlined_call_operand.vmem [shape: f32[128,40], index: 0, kind: input, shape index: {}]
  %s1 = inlined_call_operand.vmem [shape: f32[2,128], index: 1, kind: input, shape index: {}]
  %s2 = inlined_call_operand.vmem [shape: f32[2,128], index: 2, kind: input, shape index: {}]
  %s3 = inlined_call_operand.hbm [shape: f32[1,1,1], index: 3, kind: output, shape index: {}]
  %s4 = sld [smem:[#allocation0]]
  $region22: #{tpu_custom_call.1} parent=0
    _
  %s6 = ssub.s32 1, %s4
  %s7 = scalar_select 0, %s6, %s4
  $region1: #{tpu_custom_call.1} parent=0
    #allocation2 [shape = 'u8[512]{0}', space=vmem, size = 0x400, scoped, tag = 'output window, operand 0, single buffered']
    #allocation3 [shape = 's32[1]{0}', space=sflag, size = 0x4, scoped, tag = 'scoped memory for tpu_custom_call.1']
    %8 = vsyncpa [#allocation3], 0
    // Predicated region
    $region2: #{tpu_custom_call.1} parent=1 // pred_check
      _
    $region3: #{tpu_custom_call.1} parent=1 // pred_check_branch
      %10 = sbr.rel (0) target = $region5
    $region4: #{tpu_custom_call.1} parent=1 // pred_region
      _
    $region5: #{tpu_custom_call.1} parent=1 // pred_fallthru
      _
    // Predicated region
    $region6: #{tpu_custom_call.1} parent=1 // pred_check
      _
    $region7: #{tpu_custom_call.1} parent=1 // pred_check_branch
      %12 = sbr.rel (0) target = $region9
    $region8: #{tpu_custom_call.1} parent=1 // pred_region
      _
    $region9: #{tpu_custom_call.1} parent=1 // pred_fallthru
      _
    // Predicated region
    $region10: #{tpu_custom_call.1} parent=1 // pred_check
      _
    $region11: #{tpu_custom_call.1} parent=1 // pred_check_branch
      %14 = sbr.rel (0) target = $region13
    $region12: #{tpu_custom_call.1} parent=1 // pred_region
      _
    $region13: #{tpu_custom_call.1} parent=1 // pred_fallthru
      _
    %v15 = vld [vmem:[%s1] sm:$0x3]
    %v16 = vld [vmem:[%s2] sm:$0x3]
    %v17 = vsub.f32 %v15, %v16
    %v18 = vld [vmem:[%s0] sm:$0xff]
    %v19 = vld [vmem:[%s0 + $0x8] sm:$0xff]
    %v20 = vld [vmem:[%s0 + $0x10] sm:$0xff]
    %v21 = vld [vmem:[%s0 + $0x18] sm:$0xff]
    %v22 = vld [vmem:[%s0 + $0x20] sm:$0xff]
    %v23 = vld [vmem:[%s0 + $0x28] sm:$0xff]
    %v24 = vld [vmem:[%s0 + $0x30] sm:$0xff]
    %v25 = vld [vmem:[%s0 + $0x38] sm:$0xff]
    %v26 = vld [vmem:[%s0 + $0x40] sm:$0xff]
    %v27 = vld [vmem:[%s0 + $0x48] sm:$0xff]
    %v28 = vld [vmem:[%s0 + $0x50] sm:$0xff]
    %v29 = vld [vmem:[%s0 + $0x58] sm:$0xff]
    %v30 = vld [vmem:[%s0 + $0x60] sm:$0xff]
    %v31 = vld [vmem:[%s0 + $0x68] sm:$0xff]
    %v32 = vld [vmem:[%s0 + $0x70] sm:$0xff]
    %v33 = vld [vmem:[%s0 + $0x78] sm:$0xff]
    %34 = vmatprep.subr.mxu0 0.0
    %35 = vmatpush1.msra.mxu0 %v33
    %36 = vmatprep.subr.mxu0 0.0
    %37 = vmatpush1.msra.mxu0 %v32
    %38 = vmatprep.subr.mxu0 0.0
    %39 = vmatpush1.msra.mxu0 %v31
    %40 = vmatprep.subr.mxu0 0.0
    %41 = vmatpush1.msra.mxu0 %v30
    %42 = vmatprep.subr.mxu0 0.0
    %43 = vmatpush1.msra.mxu0 %v29
    %44 = vmatprep.subr.mxu0 0.0
    %45 = vmatpush1.msra.mxu0 %v28
    %46 = vmatprep.subr.mxu0 0.0
    %47 = vmatpush1.msra.mxu0 %v27
    %48 = vmatprep.subr.mxu0 0.0
    %49 = vmatpush1.msra.mxu0 %v26
    %50 = vmatprep.subr.mxu0 0.0
    %51 = vmatpush1.msra.mxu0 %v25
    %52 = vmatprep.subr.mxu0 0.0
    %53 = vmatpush1.msra.mxu0 %v24
    %54 = vmatprep.subr.mxu0 0.0
    %55 = vmatpush1.msra.mxu0 %v23
    %56 = vmatprep.subr.mxu0 0.0
    %57 = vmatpush1.msra.mxu0 %v22
    %58 = vmatprep.subr.mxu0 0.0
    %59 = vmatpush1.msra.mxu0 %v21
    %60 = vmatprep.subr.mxu0 0.0
    %61 = vmatpush1.msra.mxu0 %v20
    %62 = vmatprep.subr.mxu0 0.0
    %63 = vmatpush1.msra.mxu0 %v19
    %64 = vmatprep.subr.mxu0 0.0
    %65 = vmatpush1.msra.mxu0 %v18
    %66 = vmatprep.subr.mxu0 0.0
    %67 = vmatpush2.msra.mxu0 0.0
    %68 = vmatprep.subr.mxu0 0.0
    %69 = vmatpush2.msra.mxu0 0.0
    %70 = vmatprep.subr.mxu0 0.0
    %71 = vmatpush2.msra.mxu0 0.0
    %72 = vmatprep.subr.mxu0 0.0
    %73 = vmatpush2.msra.mxu0 0.0
    %74 = vmatprep.subr.mxu0 0.0
    %75 = vmatpush2.msra.mxu0 0.0
    %76 = vmatprep.subr.mxu0 0.0
    %77 = vmatpush2.msra.mxu0 0.0
    %78 = vmatprep.subr.mxu0 0.0
    %79 = vmatpush2.msra.mxu0 0.0
    %80 = vmatprep.subr.mxu0 0.0
    %81 = vmatpush2.msra.mxu0 0.0
    %82 = vmatprep.subr.mxu0 0.0
    %83 = vmatpush2.msra.mxu0 0.0
    %84 = vmatprep.subr.mxu0 0.0
    %85 = vmatpush2.msra.mxu0 0.0
    %86 = vmatprep.subr.mxu0 0.0
    %87 = vmatpush2.msra.mxu0 0.0
    %88 = vmatprep.subr.mxu0 0.0
    %89 = vmatpush2.msra.mxu0 0.0
    %90 = vmatprep.subr.mxu0 0.0
    %91 = vmatpush2.msra.mxu0 0.0
    %92 = vmatprep.subr.mxu0 0.0
    %93 = vmatpush2.msra.mxu0 0.0
    %94 = vmatprep.subr.mxu0 0.0
    %95 = vmatpush2.msra.mxu0 0.0
    %96 = vmatprep.subr.mxu0 0.0
    %97 = vmatpush2.msra.mxu0 0.0
    %98 = vmatprep.mubr.f32.mxu0 0.0
    %99 = vmatmul.mubr.f32.gmra.mxu0 %v17
    %v100 = vpop.f32.mrf.mxu0
    %v101 = vadd.f32 0.0, %v100
    %v102 = vpop.f32.mrf.mxu0
    %103 = vdwg.mxu0
    %v104 = vand.u32 2147483647, %v101
    %vm105 = vcmask 320512
    %v106 = vsel %vm105, %v104, 0.0
    %107 = vadd.xlane.f32.xlu0 %v106
    %v108 = vpop.xlane.xlu0 %107
    %v109 = vrot.slane %v108, 4
    %v110 = vadd.f32 %v108, %v109
    %v111 = vrot.slane %v110, 2
    %v112 = vadd.f32 %v110, %v111
    %v113 = vrot.slane %v112, 1
    %v114 = vadd.f32 %v112, %v113
    %s115 = vtos %v114
    %v116 = vstv %s115
    %vm117 = vcmask 0
    %118 = vst.msk [vmem:[#allocation2] sm:$0x1] %vm117, %v116
    // Predicated region
    $region14: #{tpu_custom_call.1} parent=1 // pred_check
      _
    $region15: #{tpu_custom_call.1} parent=1 // pred_check_branch
      %120 = sbr.rel (0) target = $region17
    $region16: #{tpu_custom_call.1} parent=1 // pred_region
      %s122 = ssub.s32 16, 16
      %123 = vsyncadd [#allocation3], %s122
      %s125 = sshll.u32 [#allocation2], 4
      %s126 = int_to_ptr.vmem [resolvable:$true] %s125
      %128 = dma.vmem_to_hbm [thread:$0]  %s126, 16, %s3, [#allocation3]
    $region17: #{tpu_custom_call.1} parent=1 // pred_fallthru
      _
    // Predicated region
    $region18: #{tpu_custom_call.1} parent=1 // pred_check
      _
    $region19: #{tpu_custom_call.1} parent=1 // pred_check_branch
      %130 = sbr.rel (0) target = $region21
    $region20: #{tpu_custom_call.1} parent=1 // pred_region
      %131 = dma.done [#allocation3], 16
    $region21: #{tpu_custom_call.1} parent=1 // pred_fallthru
      _
    %132 = vsyncpa [#allocation3], 1

</llo_original>
